<compile_context>
chip_gen: v7x
topology: tpu7x:2x2x1
jax: 0.10.0
libtpu: 0.0.40
codegen_flags: <defaults>
</compile_context>

<pallas_src>
import functools

import jax
import jax.numpy as jnp
from jax.experimental import pallas as pl
from jax.experimental.pallas import tpu as pltpu


def _round_up(x, m):
    return (x + m - 1) // m * m


# ---------------------------------------------------------------------------
# Kernel: one MXU matmul + bias + masked softplus.  f32 accumulate / compute,
# cast to the output dtype only at the store.
# ---------------------------------------------------------------------------
def _multihead_fused_kernel(min_std, split, dx, x_ref, w_ref, b_ref, out_ref):
    """Output column layout (lane-dense, zero-padded to a multiple of 128):
      [0, split)                      Bernoulli logits
      [split, split+dx)               mu (flat)
      [split+dx, split+2*dx)          softplus(raw) + min_std  (std, flat)
      [split+2*dx, split+2*dx+mdn_k)  mixture (categorical) logits
      [split+2*dx+mdn_k, n_pad)       zero padding
    """
    y = jnp.dot(x_ref[...], w_ref[...],
                preferred_element_type=jnp.float32) + b_ref[...]
    # Elementwise column mask avoids misaligned (non-128) slices in VMEM.
    col = jax.lax.broadcasted_iota(jnp.int32, y.shape, 1)
    is_std = (col >= split + dx) & (col < split + 2 * dx)
    out_ref[...] = jnp.where(is_std, jax.nn.softplus(y) + min_std,
                             y).astype(out_ref.dtype)


# ---------------------------------------------------------------------------
# One-time parameter preparation (hoisted out of the per-forward path).
# ---------------------------------------------------------------------------
def prepare_multihead_params(params, *, in_n, mdn_k, mm_dtype=jnp.bfloat16):
    """Fuse the trunk Linear with the two head Linears; pad to lane-dense width."""
    w1, b1, wb, bb, ws, bs = [jnp.asarray(p, jnp.float32) for p in params]
    split = wb.shape[1]
    mdn_shape = ws.shape[1]
    dx = (mdn_shape - mdn_k) // 2            # mdn_k * (out_n - split)

    w_fused = jnp.concatenate([w1[:, :in_n] @ wb, w1[:, in_n:] @ ws], axis=1)
    b_fused = jnp.concatenate([b1[:, :in_n] @ wb + bb,
                               b1[:, in_n:] @ ws + bs], axis=1)

    n_out = split + mdn_shape                # split + 2*dx + mdn_k
    n_pad = _round_up(n_out, 128)            # lane-dense output width
    w_fused = jnp.pad(w_fused, ((0, 0), (0, n_pad - n_out))).astype(mm_dtype)
    b_fused = jnp.pad(b_fused, ((0, 0), (0, n_pad - n_out))).astype(jnp.float32)

    return {
        "w_fused": w_fused, "b_fused": b_fused,
        "in_n": in_n, "split": split, "dx": dx, "mdn_k": mdn_k,
        "n_out": n_out, "n_pad": n_pad, "mm_dtype": mm_dtype,
        "out_dim": dx // mdn_k,
    }


# ---------------------------------------------------------------------------
# Forward wrapper.
# ---------------------------------------------------------------------------
def multihead_forward(x, prep, *, min_std, tm_max=2048,
                      out_dtype=jnp.float32, return_fused_slab=False):
    """x: (B, L, in_n).  Returns dict of distribution parameters, or
    (slab, offsets) when return_fused_slab=True."""
    B, L, in_n = x.shape
    assert in_n == prep["in_n"]
    M = B * L
    split, dx, mdn_k = prep["split"], prep["dx"], prep["mdn_k"]
    n_pad = prep["n_pad"]
    mm_dtype = prep["mm_dtype"]
    w_fused, b_fused = prep["w_fused"], prep["b_fused"]

    # ---- row tiling: big tiles (amortize ~0.35us per-step overhead), but keep
    # >=2 grid steps so v7x's 2 TensorCores both get work under "parallel".
    tm = min(tm_max, _round_up(max(pl.cdiv(M, 2), 1), 8))
    tm = max(tm, 8)
    M_pad = _round_up(M, tm)
    grid_m = M_pad // tm

    x2 = x.reshape(M, in_n).astype(mm_dtype)
    if M_pad != M:
        x2 = jnp.pad(x2, ((0, M_pad - M), (0, 0)))

    # ---- VMEM budget: account for lane-padding of the narrow x tile.
    elt_in = jnp.dtype(mm_dtype).itemsize
    elt_out = jnp.dtype(out_dtype).itemsize
    in_n_pad = _round_up(in_n, 128)
    need = (2 * tm * in_n_pad * elt_in        # double-buffered x tiles (lane-padded)
            + 2 * tm * n_pad * elt_out        # double-buffered output tiles
            + in_n_pad * n_pad * elt_in       # resident fused weight
            + 8 * n_pad * 4)                  # resident bias (sublane-padded)
    try:
        vmem_cap = int(pltpu.get_tpu_info().vmem_capacity_bytes)
    except Exception:
        vmem_cap = 64 * 1024 * 1024           # conservative (v7x per-TC)
    vmem_limit = int(min(max(2 * need, 16 * 1024 * 1024), (3 * vmem_cap) // 4))

    cost = pl.CostEstimate(
        flops=2 * M_pad * in_n * n_pad,
        transcendentals=M_pad * n_pad,        # softplus exp/log
        bytes_accessed=(M_pad * in_n * elt_in + in_n * n_pad * elt_in
                        + n_pad * 4 + M_pad * n_pad * elt_out))

    out_full = pl.pallas_call(
        functools.partial(_multihead_fused_kernel, min_std, split, dx),
        out_shape=jax.ShapeDtypeStruct((M_pad, n_pad), out_dtype),
        grid_spec=pltpu.PrefetchScalarGridSpec(
            num_scalar_prefetch=0,
            grid=(grid_m,),
            in_specs=[
                pl.BlockSpec((tm, in_n), lambda i: (i, 0)),      # x tile
                pl.BlockSpec((in_n, n_pad), lambda i: (0, 0)),   # fused W (resident)
                pl.BlockSpec((1, n_pad), lambda i: (0, 0)),      # fused b (resident)
            ],
            out_specs=pl.BlockSpec((tm, n_pad), lambda i: (i, 0)),
        ),
        compiler_params=pltpu.CompilerParams(
            dimension_semantics=("parallel",),
            vmem_limit_bytes=vmem_limit),
        cost_estimate=cost,
    )(x2, w_fused, b_fused)

    out = out_full[:M]

    if return_fused_slab:
        # Hand back the lane-dense slab plus column offsets so downstream
        # consumers can index lazily and skip a second memory pass.
        offsets = {
            "bin": (0, split),
            "mu": (split, split + dx),
            "std": (split + dx, split + 2 * dx),
            "cat": (split + 2 * dx, split + 2 * dx + mdn_k),
        }
        return out.reshape(B, L, n_pad), offsets

    out_dim = prep["out_dim"]
    bin_logits = out[:, :split]
    mu = out[:, split:split + dx]
    std = out[:, split + dx:split + 2 * dx]
    cat_logits = out[:, split + 2 * dx:split + 2 * dx + mdn_k]
    return {
        "lcd": {  # thd.Bernoulli(logits=...)
            "logits": bin_logits.reshape(B, L, split),
        },
        "proprio": {  # thd.MixtureSameFamily(Categorical, MultivariateNormal(diag))
            "mixture_logits": cat_logits.reshape(B, L, mdn_k),
            "mu": mu.reshape(B, L, mdn_k, out_dim),
            "std": std.reshape(B, L, mdn_k, out_dim),
        },
    }


def _reference_forward(x, params, *, split, mdn_k, min_std):
    """Plain-JAX reference mirroring the PyTorch module (unfused weights)."""
    w1, b1, wb, bb, ws, bs = params
    B, L, in_n = x.shape
    h = x @ w1 + b1[0]
    xb, xs = h[..., :in_n], h[..., in_n:]
    bin_logits = xb @ wb + bb[0]
    mdn = xs @ ws + bs[0]
    dx = (ws.shape[1] - mdn_k) // 2
    mu = mdn[..., :dx].reshape(B, L, mdn_k, -1)
    std = (jax.nn.softplus(mdn[..., dx:2 * dx]) + min_std).reshape(B, L, mdn_k, -1)
    cat = mdn[..., 2 * dx:]
    return bin_logits, cat, mu, std


if __name__ == "__main__":
    # Small shapes consistent with the module's forward.
    B, L = 2, 8
    in_n, out_n, split = 32, 12, 4
    mdn_k, min_std = 3, 0.01
    dx = mdn_k * (out_n - split)
    mdn_shape = mdn_k + 2 * dx

    key = jax.random.PRNGKey(0)
    ks = jax.random.split(key, 7)
    x = jax.random.normal(ks[0], (B, L, in_n), jnp.float32)

    # Deterministic synthetic parameters (stored as (in, out); biases as (1, out)).
    w1 = 0.1 * jax.random.normal(ks[1], (in_n, 2 * in_n), jnp.float32)
    b1 = 0.1 * jax.random.normal(ks[2], (1, 2 * in_n), jnp.float32)
    wb = 0.1 * jax.random.normal(ks[3], (in_n, split), jnp.float32)
    bb = 0.1 * jax.random.normal(ks[4], (1, split), jnp.float32)
    ws = 0.1 * jax.random.normal(ks[5], (in_n, mdn_shape), jnp.float32)
    bs = 0.1 * jax.random.normal(ks[6], (1, mdn_shape), jnp.float32)
    params = (w1, b1, wb, bb, ws, bs)

    ref_bin, ref_cat, ref_mu, ref_std = _reference_forward(
        x, params, split=split, mdn_k=mdn_k, min_std=min_std)

    # f32 operands, f32 output: tight check (fusion exact up to f32 rounding).
    prep_f32 = prepare_multihead_params(params, in_n=in_n, mdn_k=mdn_k,
                                        mm_dtype=jnp.float32)
    out = multihead_forward(x, prep_f32, min_std=min_std,
                            out_dtype=jnp.float32)
    out = jax.block_until_ready(out)
    assert jnp.allclose(out["lcd"]["logits"], ref_bin, atol=1e-4)
    assert jnp.allclose(out["proprio"]["mixture_logits"], ref_cat, atol=1e-4)
    assert jnp.allclose(out["proprio"]["mu"], ref_mu, atol=1e-4)
    assert jnp.allclose(out["proprio"]["std"], ref_std, atol=1e-4)

    # bf16 MXU operands + bf16 output (f32 accumulation): loose tolerance.
    prep_bf16 = prepare_multihead_params(params, in_n=in_n, mdn_k=mdn_k,
                                         mm_dtype=jnp.bfloat16)
    out16 = multihead_forward(x, prep_bf16, min_std=min_std,
                              out_dtype=jnp.bfloat16)
    out16 = jax.block_until_ready(out16)
    assert jnp.allclose(out16["lcd"]["logits"].astype(jnp.float32), ref_bin, atol=5e-2)
    assert jnp.allclose(out16["proprio"]["mixture_logits"].astype(jnp.float32), ref_cat, atol=5e-2)
    assert jnp.allclose(out16["proprio"]["mu"].astype(jnp.float32), ref_mu, atol=5e-2)
    assert jnp.allclose(out16["proprio"]["std"].astype(jnp.float32), ref_std, atol=5e-2)

    # Slab path (no second slicing pass): check the fused columns directly.
    slab, offs = multihead_forward(x, prep_f32, min_std=min_std,
                                   out_dtype=jnp.float32,
                                   return_fused_slab=True)
    slab = jax.block_until_ready(slab)
    lo, hi = offs["bin"]
    assert jnp.allclose(slab[..., lo:hi], ref_bin, atol=1e-4)
    lo, hi = offs["std"]
    assert jnp.allclose(slab[..., lo:hi].reshape(B, L, mdn_k, -1), ref_std, atol=1e-4)

    print("KERNEL_OK")
</pallas_src>

<mosaic_0001>
module attributes {stable_mosaic.version = 11 : i64} {
  func.func @_multihead_fused_kernel(%arg0: i32, %arg1: memref<8x32xf32, #tpu.memory_space<vmem>>, %arg2: memref<32x128xf32, #tpu.memory_space<vmem>>, %arg3: memref<1x128xf32, #tpu.memory_space<vmem>>, %arg4: memref<8x128xf32, #tpu.memory_space<vmem>>) attributes {dimension_semantics = [#tpu.dimension_semantics<parallel>], iteration_bounds = array<i64: 2>, scalar_prefetch = 0 : i64, scratch_operands = 0 : i64, tpu.core_type = #tpu.core_type<tc>, window_params = [{transform_indices = @transform_0, window_bounds = array<i64: 8, 32>}, {pipeline_mode = #tpu.pipeline_mode<synchronous>, transform_indices = @transform_1, window_bounds = array<i64: 32, 128>}, {pipeline_mode = #tpu.pipeline_mode<synchronous>, transform_indices = @transform_2, window_bounds = array<i64: 1, 128>}, {transform_indices = @transform_3, window_bounds = array<i64: 8, 128>}]} {
    %c0 = arith.constant 0 : index
    %c0_0 = arith.constant 0 : index
    %0 = vector.load %arg1[%c0, %c0_0] : memref<8x32xf32, #tpu.memory_space<vmem>>, vector<8x32xf32>
    %c0_1 = arith.constant 0 : index
    %c0_2 = arith.constant 0 : index
    %1 = vector.load %arg2[%c0_1, %c0_2] : memref<32x128xf32, #tpu.memory_space<vmem>>, vector<32x128xf32>
    %cst = arith.constant dense<0.000000e+00> : vector<8x128xf32>
    %2 = tpu.matmul %0, %1, %cst {dimension_numbers = #tpu.dot_dimension_numbers<[1], [0], [0], [1], [0, 0, 1, 1], [], []>} : vector<8x32xf32>, vector<32x128xf32>, vector<8x128xf32> -> vector<8x128xf32>
    %c0_3 = arith.constant 0 : index
    %c0_4 = arith.constant 0 : index
    %3 = vector.load %arg3[%c0_3, %c0_4] : memref<1x128xf32, #tpu.memory_space<vmem>>, vector<1x128xf32>
    %4 = vector.broadcast %3 : vector<1x128xf32> to vector<8x128xf32>
    %5 = arith.addf %2, %4 : vector<8x128xf32>
    %6 = tpu.iota {dimensions = array<i32: 1>} : vector<8x128xi32>
    %c28_i32 = arith.constant 28 : i32
    %7 = vector.broadcast %c28_i32 : i32 to vector<8x128xi32>
    %8 = arith.cmpi sge, %6, %7 : vector<8x128xi32>
    %c52_i32 = arith.constant 52 : i32
    %9 = vector.broadcast %c52_i32 : i32 to vector<8x128xi32>
    %10 = arith.cmpi slt, %6, %9 : vector<8x128xi32>
    %11 = arith.andi %8, %10 : vector<8x128xi1>
    %cst_5 = arith.constant 0.000000e+00 : f32
    %12 = vector.broadcast %cst_5 : f32 to vector<8x128xf32>
    %13 = arith.maximumf %5, %12 : vector<8x128xf32>
    %14 = vector.broadcast %cst_5 : f32 to vector<8x128xf32>
    %15 = arith.subf %5, %14 : vector<8x128xf32>
    %16 = arith.cmpf one, %15, %15 : vector<8x128xf32>
    %17 = vector.broadcast %cst_5 : f32 to vector<8x128xf32>
    %18 = arith.addf %5, %17 : vector<8x128xf32>
    %19 = math.absf %15 : vector<8x128xf32>
    %cst_6 = arith.constant 0.000000e+00 : f32
    %20 = vector.broadcast %cst_6 : f32 to vector<8x128xf32>
    %21 = arith.subf %20, %19 : vector<8x128xf32>
    %22 = math.exp %21 : vector<8x128xf32>
    %23 = math.log1p %22 : vector<8x128xf32>
    %24 = arith.addf %13, %23 : vector<8x128xf32>
    %25 = arith.select %16, %18, %24 : vector<8x128xi1>, vector<8x128xf32>
    %cst_7 = arith.constant 0.00999999977 : f32
    %26 = vector.broadcast %cst_7 : f32 to vector<8x128xf32>
    %27 = arith.addf %25, %26 : vector<8x128xf32>
    %28 = arith.select %11, %27, %5 : vector<8x128xi1>, vector<8x128xf32>
    %c0_8 = arith.constant 0 : index
    %c0_9 = arith.constant 0 : index
    %29 = vector.load %arg4[%c0_8, %c0_9] : memref<8x128xf32, #tpu.memory_space<vmem>>, vector<8x128xf32>
    tpu.vector_store %arg4[%c0_8, %c0_9], %28 {strides = array<i32>} : memref<8x128xf32, #tpu.memory_space<vmem>>, vector<8x128xf32>,
    return
  }
  func.func @transform_0(%arg0: i32) -> (i32, i32) {
    %c0_i32 = arith.constant 0 : i32
    %c0_i32_0 = arith.constant 0 : i32
    return %arg0, %c0_i32 : i32, i32
  }
  func.func @transform_1(%arg0: i32) -> (i32, i32) {
    %c0_i32 = arith.constant 0 : i32
    %c0_i32_0 = arith.constant 0 : i32
    %c0_i32_1 = arith.constant 0 : i32
    return %c0_i32, %c0_i32_0 : i32, i32
  }
  func.func @transform_2(%arg0: i32) -> (i32, i32) {
    %c0_i32 = arith.constant 0 : i32
    %c0_i32_0 = arith.constant 0 : i32
    %c0_i32_1 = arith.constant 0 : i32
    return %c0_i32, %c0_i32_0 : i32, i32
  }
  func.func @transform_3(%arg0: i32) -> (i32, i32) {
    %c0_i32 = arith.constant 0 : i32
    %c0_i32_0 = arith.constant 0 : i32
    return %arg0, %c0_i32 : i32, i32
  }
}

</mosaic_0001>

<llo_original>
// kernel: tpu_custom_call.1
$region0: #{tpu_custom_call.1}
  #allocation0 [shape = 'u32[]', space=smem, size = 0x4, offset = 0x4, fixed_abs, tag = 'smem constant byte address 0x4 - core index']
  #allocation1 [shape = 'u32[144,128]{1,0:T(1,128)}', space=vmem, size = 0x12000, scoped, tag = 'internal scratch']
  %s0 = inlined_call_operand.hbm [shape: f32[16,32], index: 0, kind: input, shape index: {}]
  %s1 = inlined_call_operand.hbm [shape: f32[32,128], index: 1, kind: input, shape index: {}]
  %s2 = inlined_call_operand.vmem [shape: f32[1,128], index: 2, kind: input, shape index: {}]
  %s3 = inlined_call_operand.hbm [shape: f32[16,128], index: 3, kind: output, shape index: {}]
  %s4 = sld [smem:[#allocation0]]
  $region53: #{tpu_custom_call.1} parent=0
    _
  %s6 = ssub.s32 1, %s4
  %s7 = scalar_select 0, %s6, %s4
  $region1: #{tpu_custom_call.1} parent=0
    #allocation2 [shape = 'u8[8192]{0}', space=vmem, size = 0x2000, scoped, tag = 'input window, operand 0']
    #allocation3 [shape = 's32[2]{0}', space=sflag, size = 0x8, scoped, tag = 'scoped memory for tpu_custom_call.1']
    #allocation4 [shape = 's32[2]{0}', space=sflag, size = 0x8, scoped, tag = 'scoped memory for tpu_custom_call.1']
    #allocation5 [shape = 'u8[16384]{0}', space=vmem, size = 0x4000, scoped, tag = 'input window, operand 1, single buffered']
    #allocation6 [shape = 's32[1]{0}', space=sflag, size = 0x4, scoped, tag = 'scoped memory for tpu_custom_call.1']
    #allocation7 [shape = 'u8[8192]{0}', space=vmem, size = 0x2000, scoped, tag = 'output window, operand 0']
    %8 = vsyncpa [#allocation3], 0
    %s9 = scalar_lea.sflag [#allocation3], 1
    %10 = vsyncpa %s9, 0
    %11 = vsyncpa [#allocation6], 0
    %12 = vsyncpa [#allocation4], 0
    %s13 = scalar_lea.sflag [#allocation4], 1
    %14 = vsyncpa %s13, 0
    loop: start=0, step=1, limit=4
    $region2: #{tpu_custom_call.1} parent=1 // loop_pre_header
      _
    $region3: #{tpu_custom_call.1} parent=1 // loop_header
      %s16 = sphi 0, %s20
      %p17 = scmp.ge.s32.totalorder %s16, 4
      %s26 = sphi 0, %s28
      %s29 = sphi 0, %s26
      %s30 = sphi 0, %s29
      %s46 = sphi 0, %s30
      %s50 = sphi 0, %s50
      %s52 = sphi 0, %s50
      %s53 = sphi 0, %s52
      %s67 = sphi 0, %s53
      %s71 = sphi 0, %s71
      %s73 = sphi 0, %s71
      %s74 = sphi 0, %s73
      %s88 = sphi 0, %s74
      %s94 = sphi 0, %s96
      %s97 = sphi 0, %s94
      %s98 = sphi 0, %s97
      %s114 = sphi 0, %s98
    $region4: #{tpu_custom_call.1} parent=1 // loop_header_branch
      %19 = sbr.rel (%p17) target = $region8
    $region5: #{tpu_custom_call.1} parent=1 // loop_body
      %s21 = ssub.s32 %s16, 1
      %s22 = ssub.s32 %s16, 2
      %s23 = sadd.s32 %s16, 1
      %s24 = ssub.s32 %s16, %s23
      %p25 = scmp.eq.s32.totalorder %s24, 0
      %s27 = sadd.s32 %s26, 1
      %s28 = scalar_select %p25, %s26, %s27
      %p31 = pneg %p25
      %p32 = scmp.eq.s32.totalorder %s16, 1
      %p33 = por %p31, %p32
      %p34 = scmp.ne.s32.totalorder %s26, %s29
      %p35 = scmp.eq.s32.totalorder %s16, 0
      %p36 = por %p34, %p35
      %p37 = scmp.ne.s32.totalorder %s26, %s29
      %p38 = scmp.eq.s32.totalorder %s21, 1
      %p39 = por %p37, %p38
      %p40 = scmp.ne.s32.totalorder %s29, %s30
      %p41 = scmp.eq.s32.totalorder %s21, 0
      %p42 = por %p40, %p41
      %p43 = scmp.ne.s32.totalorder %s29, %s30
      %p44 = scmp.eq.s32.totalorder %s22, 1
      %p45 = por %p43, %p44
      %p47 = scmp.ne.s32.totalorder %s30, %s46
      %p48 = scmp.eq.s32.totalorder %s22, 0
      %p49 = por %p47, %p48
      %s51 = sadd.s32 %s50, 1
      %p54 = scmp.eq.s32.totalorder %s16, 1
      %p55 = scmp.ne.s32.totalorder %s50, %s52
      %p56 = scmp.eq.s32.totalorder %s16, 0
      %p57 = por %p55, %p56
      %p58 = scmp.ne.s32.totalorder %s50, %s52
      %p59 = scmp.eq.s32.totalorder %s21, 1
      %p60 = por %p58, %p59
      %p61 = scmp.ne.s32.totalorder %s52, %s53
      %p62 = scmp.eq.s32.totalorder %s21, 0
      %p63 = por %p61, %p62
      %p64 = scmp.ne.s32.totalorder %s52, %s53
      %p65 = scmp.eq.s32.totalorder %s22, 1
      %p66 = por %p64, %p65
      %p68 = scmp.ne.s32.totalorder %s53, %s67
      %p69 = scmp.eq.s32.totalorder %s22, 0
      %p70 = por %p68, %p69
      %s72 = sadd.s32 %s71, 1
      %p75 = scmp.eq.s32.totalorder %s16, 1
      %p76 = scmp.ne.s32.totalorder %s71, %s73
      %p77 = scmp.eq.s32.totalorder %s16, 0
      %p78 = por %p76, %p77
      %p79 = scmp.ne.s32.totalorder %s71, %s73
      %p80 = scmp.eq.s32.totalorder %s21, 1
      %p81 = por %p79, %p80
      %p82 = scmp.ne.s32.totalorder %s73, %s74
      %p83 = scmp.eq.s32.totalorder %s21, 0
      %p84 = por %p82, %p83
      %p85 = scmp.ne.s32.totalorder %s73, %s74
      %p86 = scmp.eq.s32.totalorder %s22, 1
      %p87 = por %p85, %p86
      %p89 = scmp.ne.s32.totalorder %s74, %s88
      %p90 = scmp.eq.s32.totalorder %s22, 0
      %p91 = por %p89, %p90
      %s92 = ssub.s32 %s16, %s23
      %p93 = scmp.eq.s32.totalorder %s92, 0
      %s95 = sadd.s32 %s94, 1
      %s96 = scalar_select %p93, %s94, %s95
      %p99 = pneg %p93
      %p100 = scmp.eq.s32.totalorder %s16, 1
      %p101 = por %p99, %p100
      %p102 = scmp.ne.s32.totalorder %s94, %s97
      %p103 = scmp.eq.s32.totalorder %s16, 0
      %p104 = por %p102, %p103
      %p105 = scmp.ne.s32.totalorder %s94, %s97
      %p106 = scmp.eq.s32.totalorder %s21, 1
      %p107 = por %p105, %p106
      %p108 = scmp.ne.s32.totalorder %s97, %s98
      %p109 = scmp.eq.s32.totalorder %s21, 0
      %p110 = por %p108, %p109
      %p111 = scmp.ne.s32.totalorder %s97, %s98
      %p112 = scmp.eq.s32.totalorder %s22, 1
      %p113 = por %p111, %p112
      %p115 = scmp.ne.s32.totalorder %s98, %s114
      %p116 = scmp.eq.s32.totalorder %s22, 0
      %p117 = por %p115, %p116
      %p118 = scmp.le.s32.totalorder 1, %s16
      %p119 = scmp.lt.s32.totalorder %s16, 3
      %p120 = pnand %p118, %p119
      %p121 = pneg %p120
      // Predicated region
      $region9: #{tpu_custom_call.1} parent=5 // pred_check
        _
      $region10: #{tpu_custom_call.1} parent=5 // pred_check_branch
        %123 = sbr.rel (%p120) target = $region12
      $region11: #{tpu_custom_call.1} parent=5 // pred_region
        %s124 = ssub.s32 %s16, 1
        // Predicated region
        $region13: #{tpu_custom_call.1} parent=11 // pred_check
          %p125 = pneg %p63
        $region14: #{tpu_custom_call.1} parent=11 // pred_check_branch
          %127 = sbr.rel (%p125) target = $region16
        $region15: #{tpu_custom_call.1} parent=11 // pred_region
          %s129 = ssub.s32 512, 512
          %130 = vsyncadd [#allocation6], %s129
          %s131 = sshll.u32 [#allocation5], 4
          %s132 = int_to_ptr.vmem [resolvable:$true] %s131
          %137 = dma.hbm_to_vmem [thread:$0]  %s1, 512, %s132, [#allocation6], 128, 128, 8
        $region16: #{tpu_custom_call.1} parent=11 // pred_fallthru
          _
        // Predicated region
        $region17: #{tpu_custom_call.1} parent=11 // pred_check
          %p138 = pneg %p84
        $region18: #{tpu_custom_call.1} parent=11 // pred_check_branch
          %140 = sbr.rel (%p138) target = $region20
        $region19: #{tpu_custom_call.1} parent=11 // pred_region
          _
        $region20: #{tpu_custom_call.1} parent=11 // pred_fallthru
          _
      $region12: #{tpu_custom_call.1} parent=5 // pred_fallthru
        _
      %p141 = scmp.lt.s32.totalorder %s16, 2
      // Predicated region
      $region21: #{tpu_custom_call.1} parent=5 // pred_check
        %p142 = pneg %p141
      $region22: #{tpu_custom_call.1} parent=5 // pred_check_branch
        %144 = sbr.rel (%p142) target = $region24
      $region23: #{tpu_custom_call.1} parent=5 // pred_region
        // Predicated region
        $region25: #{tpu_custom_call.1} parent=23 // pred_check
          %p145 = pneg %p36
        $region26: #{tpu_custom_call.1} parent=23 // pred_check_branch
          %147 = sbr.rel (%p145) target = $region28
        $region27: #{tpu_custom_call.1} parent=23 // pred_region
          %s148 = sand.u32 %s26, 1
          %s149 = scalar_lea.sflag [#allocation3], %s148
          %s150 = sand.u32 %s26, 1
          %s151 = smul.addr %s150, 8
          %s152 = scalar_lea.vmem [#allocation2], %s151
          %s154 = ssub.s32 128, 128
          %155 = vsyncadd %s149, %s154
          %s156 = smul.addr %s16, 128
          %s157 = scalar_lea.hbm %s0, %s156
          %s159 = sshll.u32 %s152, 4
          %s160 = int_to_ptr.vmem [resolvable:$true] %s159
          %162 = dma.hbm_to_vmem [thread:$0]  %s157, 128, %s160, %s149
        $region28: #{tpu_custom_call.1} parent=23 // pred_fallthru
          _
      $region24: #{tpu_custom_call.1} parent=5 // pred_fallthru
        _
      %p163 = scmp.le.s32.totalorder 1, %s16
      %p164 = scmp.lt.s32.totalorder %s16, 3
      %p165 = pnand %p163, %p164
      %p166 = pneg %p165
      // Predicated region
      $region29: #{tpu_custom_call.1} parent=5 // pred_check
        _
      $region30: #{tpu_custom_call.1} parent=5 // pred_check_branch
        %168 = sbr.rel (%p165) target = $region32
      $region31: #{tpu_custom_call.1} parent=5 // pred_region
        %s169 = ssub.s32 %s16, 1
        %s170 = sand.u32 %s29, 1
        %s171 = scalar_lea.sflag [#allocation3], %s170
        %s172 = sand.u32 %s29, 1
        %s173 = smul.addr %s172, 8
        %s174 = scalar_lea.vmem [#allocation2], %s173
        // Predicated region
        $region33: #{tpu_custom_call.1} parent=31 // pred_check
          %p175 = pneg %p42
        $region34: #{tpu_custom_call.1} parent=31 // pred_check_branch
          %177 = sbr.rel (%p175) target = $region36
        $region35: #{tpu_custom_call.1} parent=31 // pred_region
          %178 = dma.done %s171, 128
        $region36: #{tpu_custom_call.1} parent=31 // pred_fallthru
          _
        // Predicated region
        $region37: #{tpu_custom_call.1} parent=31 // pred_check
          %p179 = pneg %p63
        $region38: #{tpu_custom_call.1} parent=31 // pred_check_branch
          %181 = sbr.rel (%p179) target = $region40
        $region39: #{tpu_custom_call.1} parent=31 // pred_region
          %182 = dma.done [#allocation6], 512
        $region40: #{tpu_custom_call.1} parent=31 // pred_fallthru
          _
        %s183 = sand.u32 %s29, 1
        %s184 = scalar_lea.sflag [#allocation3], %s183
        %s185 = sand.u32 %s29, 1
        %s186 = smul.addr %s185, 8
        %s187 = scalar_lea.vmem [#allocation2], %s186
        %p188 = pneg %p42
        %p189 = pneg %p39
        %p190 = pneg %p63
        %p191 = pneg %p60
        %p192 = pneg %p84
        %p193 = pneg %p81
        %p194 = pneg %p110
        %p195 = pneg %p107
        %s196 = sand.u32 %s97, 1
        %s197 = scalar_lea.sflag [#allocation4], %s196
        %s198 = sand.u32 %s97, 1
        %s199 = smul.addr %s198, 8
        %s200 = scalar_lea.vmem [#allocation7], %s199
        %v201 = vld [vmem:[%s174] sm:$0xff]
        %v202 = vld [vmem:[#allocation5] sm:$0xff]
        %v203 = vld [vmem:[#allocation5 + $0x8] sm:$0xff]
        %v204 = vld [vmem:[#allocation5 + $0x10] sm:$0xff]
        %v205 = vld [vmem:[#allocation5 + $0x18] sm:$0xff]
        %v206 = vld [vmem:[%s2] sm:$0x1]
        %v208 = vlaneseq
        %v209 = vshrl.u32 %v208, 7
        %v210 = vsub.s32 0, %v209
        %v211 = vrot.slane %v206, %v210
        %vm213 = vcmask 261120
        %v215 = vsel %vm213, %v201, 0
        %217 = vmatprep.subr.mxu0 0.0
        %218 = vmatpush1.msra.mxu0 %v202
        %219 = vmatprep.subr.mxu0 0.0
        %220 = vmatpush1.msra.mxu0 %v203
        %221 = vmatprep.subr.mxu0 0.0
        %222 = vmatpush1.msra.mxu0 %v204
        %223 = vmatprep.subr.mxu0 0.0
        %224 = vmatpush1.msra.mxu0 %v205
        %225 = vmatprep.subr.mxu0 0.0
        %226 = vmatpush1.msra.mxu0 0.0
        %227 = vmatprep.subr.mxu0 0.0
        %228 = vmatpush1.msra.mxu0 0.0
        %229 = vmatprep.subr.mxu0 0.0
        %230 = vmatpush1.msra.mxu0 0.0
        %231 = vmatprep.subr.mxu0 0.0
        %232 = vmatpush1.msra.mxu0 0.0
        %233 = vmatprep.subr.mxu0 0.0
        %234 = vmatpush1.msra.mxu0 0.0
        %235 = vmatprep.subr.mxu0 0.0
        %236 = vmatpush1.msra.mxu0 0.0
        %237 = vmatprep.subr.mxu0 0.0
        %238 = vmatpush1.msra.mxu0 0.0
        %239 = vmatprep.subr.mxu0 0.0
        %240 = vmatpush1.msra.mxu0 0.0
        %241 = vmatprep.subr.mxu0 0.0
        %242 = vmatpush1.msra.mxu0 0.0
        %243 = vmatprep.subr.mxu0 0.0
        %244 = vmatpush1.msra.mxu0 0.0
        %245 = vmatprep.subr.mxu0 0.0
        %246 = vmatpush1.msra.mxu0 0.0
        %247 = vmatprep.subr.mxu0 0.0
        %248 = vmatpush1.msra.mxu0 0.0
        %249 = vmatprep.subr.mxu0 0.0
        %250 = vmatpush1.msra.mxu0 0.0
        %251 = vmatprep.subr.mxu0 0.0
        %252 = vmatpush1.msra.mxu0 0.0
        %253 = vmatprep.subr.mxu0 0.0
        %254 = vmatpush1.msra.mxu0 0.0
        %255 = vmatprep.subr.mxu0 0.0
        %256 = vmatpush1.msra.mxu0 0.0
        %257 = vmatprep.subr.mxu0 0.0
        %258 = vmatpush1.msra.mxu0 0.0
        %259 = vmatprep.subr.mxu0 0.0
        %260 = vmatpush1.msra.mxu0 0.0
        %261 = vmatprep.subr.mxu0 0.0
        %262 = vmatpush1.msra.mxu0 0.0
        %263 = vmatprep.subr.mxu0 0.0
        %264 = vmatpush1.msra.mxu0 0.0
        %265 = vmatprep.subr.mxu0 0.0
        %266 = vmatpush1.msra.mxu0 0.0
        %267 = vmatprep.subr.mxu0 0.0
        %268 = vmatpush1.msra.mxu0 0.0
        %269 = vmatprep.subr.mxu0 0.0
        %270 = vmatpush1.msra.mxu0 0.0
        %271 = vmatprep.subr.mxu0 0.0
        %272 = vmatpush1.msra.mxu0 0.0
        %273 = vmatprep.subr.mxu0 0.0
        %274 = vmatpush1.msra.mxu0 0.0
        %275 = vmatprep.subr.mxu0 0.0
        %276 = vmatpush1.msra.mxu0 0.0
        %277 = vmatprep.subr.mxu0 0.0
        %278 = vmatpush1.msra.mxu0 0.0
        %279 = vmatprep.subr.mxu0 0.0
        %280 = vmatpush1.msra.mxu0 0.0
        %281 = vmatprep.mubr.f32.mxu0 0.0
        %282 = vmatmul.mubr.f32.gmra.mrb[0].mxu0 %v215
        %v283 = vpop.f32.mrb[0].mxu0
        %v284 = vadd.f32 %v211, %v283
        %v285 = vpop.f32.mrb[0].mxu0
        %286 = vdwg.mxu0
        %v287 = vlaneseq
        %v288 = vand.u32 %v287, 127
        %vm289 = vcmp.ge.s32.totalorder %v288, 28
        %vm290 = vcmp.lt.s32.totalorder %v288, 52
        %vm291 = vmand %vm289, %vm290
        %v292 = vmax.f32 %v284, 0.0
        %vm293 = vcmp.ne.f32.partialorder %v284, %v284
        %v294 = vadd.f32 %v284, 0.0
        %v295 = vand.u32 2147483647, %v284
        %v296 = vsub.f32 0.0, %v295
        %v297 = vmul.f32 %v296, 1.442695
        %v298 = vpow.pop %v297
        %v299 = vadd.f32 %v298, 1.0
        %v300 = vlog2.pop %v299
        %v301 = vmul.f32 %v300, 0.6931472
        %v302 = vmul.f32 -0.5, %v298
        %v303 = vadd.f32 %v302, 1.0
        %v304 = vmul.f32 %v303, %v298
        %v305 = vand.u32 2147483647, %v298
        %vm306 = vcmp.lt.f32.partialorder %v305, 0.0004427343
        %v307 = vsel %vm306, %v304, %v301
        %v308 = vadd.f32 %v292, %v307
        %v309 = vsel %vm293, %v294, %v308
        %v310 = vadd.f32 %v309, 0.01
        %v311 = vsel %vm291, %v310, %v284
        %312 = vst [vmem:[%s200] sm:$0xff] %v311
        %s313 = sand.u32 %s97, 1
        %s314 = scalar_lea.sflag [#allocation4], %s313
        %s315 = sand.u32 %s97, 1
        %s316 = smul.addr %s315, 8
        %s317 = scalar_lea.vmem [#allocation7], %s316
        // Predicated region
        $region41: #{tpu_custom_call.1} parent=31 // pred_check
          %p318 = pneg %p107
        $region42: #{tpu_custom_call.1} parent=31 // pred_check_branch
          %320 = sbr.rel (%p318) target = $region44
        $region43: #{tpu_custom_call.1} parent=31 // pred_region
          %s322 = ssub.s32 128, 128
          %323 = vsyncadd %s314, %s322
          %s324 = smul.addr %s21, 128
          %s325 = scalar_lea.hbm %s3, %s324
          %s327 = sshll.u32 %s317, 4
          %s328 = int_to_ptr.vmem [resolvable:$true] %s327
          %330 = dma.vmem_to_hbm [thread:$0]  %s328, 128, %s325, %s314
        $region44: #{tpu_custom_call.1} parent=31 // pred_fallthru
          _
      $region32: #{tpu_custom_call.1} parent=5 // pred_fallthru
        _
      %p331 = scmp.le.s32.totalorder 2, %s16
      // Predicated region
      $region45: #{tpu_custom_call.1} parent=5 // pred_check
        %p332 = pneg %p331
      $region46: #{tpu_custom_call.1} parent=5 // pred_check_branch
        %334 = sbr.rel (%p332) target = $region48
      $region47: #{tpu_custom_call.1} parent=5 // pred_region
        %s335 = ssub.s32 %s16, 2
        // Predicated region
        $region49: #{tpu_custom_call.1} parent=47 // pred_check
          %p336 = pneg %p113
        $region50: #{tpu_custom_call.1} parent=47 // pred_check_branch
          %338 = sbr.rel (%p336) target = $region52
        $region51: #{tpu_custom_call.1} parent=47 // pred_region
          %s339 = sand.u32 %s98, 1
          %s340 = scalar_lea.sflag [#allocation4], %s339
          %s341 = sand.u32 %s98, 1
          %s342 = smul.addr %s341, 8
          %s343 = scalar_lea.vmem [#allocation7], %s342
          %344 = dma.done %s340, 128
        $region52: #{tpu_custom_call.1} parent=47 // pred_fallthru
          _
      $region48: #{tpu_custom_call.1} parent=5 // pred_fallthru
        _
    $region6: #{tpu_custom_call.1} parent=1 // loop_footer
      %s20 = sadd.s32 1, %s16
    $region7: #{tpu_custom_call.1} parent=1 // loop_footer_branch
      %15 = sbr.rel target = $region3
    $region8: #{tpu_custom_call.1} parent=1 // loop_exit
      _
    %345 = vsyncpa [#allocation3], 1
    %s346 = scalar_lea.sflag [#allocation3], 1
    %347 = vsyncpa %s346, 1
    %348 = vsyncpa [#allocation6], 1
    %349 = vsyncpa [#allocation4], 1
    %s350 = scalar_lea.sflag [#allocation4], 1
    %351 = vsyncpa %s350, 1

</llo_original>
